<compile_context>
chip_gen: v7x
topology: tpu7x:2x2x1
jax: 0.10.0
libtpu: 0.0.40
codegen_flags: <defaults>
</compile_context>

<pallas_src>
import functools

import jax
import jax.numpy as jnp
from jax.experimental import pallas as pl
from jax.experimental.pallas import tpu as pltpu


def _round_up(x: int, m: int) -> int:
    return ((x + m - 1) // m) * m


def _vmem_capacity_bytes() -> int:
    """Physical VMEM per TensorCore; conservative 64 MiB fallback (matches v7x)."""
    try:
        info = pltpu.get_tpu_info()
        cap = getattr(info, "vmem_capacity_bytes", None)
        if cap:
            return int(cap)
    except Exception:
        pass
    return 64 * 1024 * 1024


def _ls_ce_kernel(pred_ref, xt_ref, out_ref, *,
                  confidence, off_val, n_classes, n_rows, block_rows):
    """One batch tile of the smoothed cross entropy.

    pred_ref: (TB, C) input-dtype VMEM tile of logits
    xt_ref:   (TB, 1) f32 VMEM tile with the target-class logit per row
    out_ref:  (8, 128) f32 VMEM tile; whole tile filled with this tile's partial sum
    """
    i = pl.program_id(0)

    x = pred_ref[...]                                              # (TB, C), input dtype
    tb = x.shape[0]

    # Row max in the input dtype (max is exact in bf16), then switch to f32.
    m = jnp.max(x, axis=-1, keepdims=True).astype(jnp.float32)     # (TB, 1)
    x32 = x.astype(jnp.float32)

    lse = jnp.log(jnp.sum(jnp.exp(x32 - m), axis=-1, keepdims=True))  # (TB, 1)
    sum_x = jnp.sum(x32, axis=-1, keepdims=True)                       # (TB, 1)

    # log_softmax pieces without materializing full-width logp / true_dist:
    #   logp_target   = x_t - m - lse
    #   sum_c logp_c  = sum_c x_c - C * (m + lse)
    logp_t = xt_ref[...] - m - lse                                  # (TB, 1)
    sum_logp = sum_x - jnp.float32(n_classes) * (m + lse)           # (TB, 1)

    # loss_row = -sum_c w_c * logp_c with w_target = confidence, w_other = off_val.
    loss_rows = -(jnp.float32(off_val) * sum_logp
                  + jnp.float32(confidence - off_val) * logp_t)     # (TB, 1)

    # Rows past the real batch (ragged last block) may hold garbage/NaN: replace, not multiply.
    row_ids = i * block_rows + jax.lax.broadcasted_iota(jnp.int32, (tb, 1), 0)
    loss_rows = jnp.where(row_ids < n_rows, loss_rows, 0.0)

    out_ref[...] = jnp.zeros((8, 128), jnp.float32) + jnp.sum(loss_rows)


def label_smoothing_cross_entropy(pred, target, smoothing: float = 0.1, *, block_rows=None):
    """pred: (B, C) float logits; target: (B,) integer labels. Returns scalar f32 loss."""
    B, C = pred.shape
    confidence = 1.0 - smoothing
    # Guard the degenerate C == 1 case (PyTorch fills with inf then overwrites it).
    off_val = smoothing / (C - 1) if C > 1 else 0.0

    # Target-class logit gathered in the wrapper: reads only B elements of HBM and lets the
    # kernel drop the full-width iota/compare/select.
    x_t = jnp.take_along_axis(pred, target.astype(jnp.int32)[:, None], axis=-1)
    x_t = x_t.astype(jnp.float32)                                   # (B, 1)

    # Per-generation budgets: ~8 MiB/input buffer on 128 MiB-VMEM chips (v5e/v6e),
    # ~4 MiB on 64 MiB chips (v7x); scoped limit = 3/4 of physical capacity (headroom
    # for double-buffered tiles + the in-kernel f32 temporaries).
    vmem_cap = _vmem_capacity_bytes()
    vmem_limit = min((vmem_cap * 3) // 4, 96 * 1024 * 1024)
    tile_budget = 4 * 1024 * 1024 if vmem_cap <= 64 * 1024 * 1024 else 8 * 1024 * 1024

    if block_rows is None:
        # VMEM layout pads the lane axis to a multiple of 128, so budget against that
        # (the HBM data itself is NOT padded — the block uses the full-extent C).
        itemsize = jnp.dtype(pred.dtype).itemsize
        bytes_per_row = max(128, _round_up(C, 128)) * itemsize
        tb = max(8, (tile_budget // bytes_per_row // 8) * 8)
    else:
        tb = max(8, _round_up(block_rows, 8))
    tb = min(tb, _round_up(B, 8))

    num_tiles = pl.cdiv(B, tb)    # ragged last block allowed; no batch pad copy

    kernel = functools.partial(
        _ls_ce_kernel,
        confidence=confidence,
        off_val=off_val,
        n_classes=C,
        n_rows=B,
        block_rows=tb,
    )

    out = pl.pallas_call(
        kernel,
        out_shape=jax.ShapeDtypeStruct((num_tiles * 8, 128), jnp.float32),
        grid_spec=pltpu.PrefetchScalarGridSpec(
            num_scalar_prefetch=0,
            grid=(num_tiles,),
            in_specs=[
                pl.BlockSpec((tb, C), lambda i: (i, 0)),   # full-extent class axis
                pl.BlockSpec((tb, 1), lambda i: (i, 0)),
            ],
            out_specs=pl.BlockSpec((8, 128), lambda i: (i, 0)),
        ),
        compiler_params=pltpu.CompilerParams(
            dimension_semantics=("parallel",),
            vmem_limit_bytes=vmem_limit,
        ),
    )(pred, x_t)

    # One partial sum per tile (each (8,128) block is filled with the same value).
    partials = out[0::8, 0]
    return jnp.sum(partials) / jnp.float32(B)


def _reference(pred, target, smoothing=0.1):
    """Plain-JAX reference mirroring the PyTorch module."""
    confidence = 1.0 - smoothing
    B, C = pred.shape
    logp = jax.nn.log_softmax(pred.astype(jnp.float32), axis=-1)
    true_dist = jnp.full((B, C), smoothing / (C - 1), dtype=jnp.float32)
    true_dist = true_dist.at[jnp.arange(B), target].set(confidence)
    return jnp.mean(jnp.sum(-true_dist * logp, axis=-1))


if __name__ == "__main__":
    key = jax.random.PRNGKey(0)
    k1, k2, k3, k4, k5, k6 = jax.random.split(key, 6)

    # Test 1: B=8, C=32, f32 (C deliberately not a multiple of 128 — full-extent block).
    B, C = 8, 32
    pred = jax.random.normal(k1, (B, C), dtype=jnp.float32)
    target = jax.random.randint(k2, (B,), 0, C, dtype=jnp.int32)
    loss = jax.block_until_ready(label_smoothing_cross_entropy(pred, target, smoothing=0.1))
    ref = _reference(pred, target, smoothing=0.1)
    assert jnp.allclose(loss, ref, atol=1e-5, rtol=1e-5), (loss, ref)

    # Test 2: B=5 (ragged block, B not a multiple of 8) with bf16 logits.
    B2, C2 = 5, 32
    pred2 = jax.random.normal(k3, (B2, C2), dtype=jnp.bfloat16)
    target2 = jax.random.randint(k4, (B2,), 0, C2, dtype=jnp.int32)
    loss2 = jax.block_until_ready(label_smoothing_cross_entropy(pred2, target2, smoothing=0.1))
    ref2 = _reference(pred2.astype(jnp.float32), target2, smoothing=0.1)
    assert jnp.allclose(loss2, ref2, atol=2e-2, rtol=2e-2), (loss2, ref2)

    # Test 3: multi-tile grid with a ragged trailing block (B=19, tb=8 -> 3 tiles), C=96.
    B3, C3 = 19, 96
    pred3 = jax.random.normal(k5, (B3, C3), dtype=jnp.float32)
    target3 = jax.random.randint(k6, (B3,), 0, C3, dtype=jnp.int32)
    loss3 = jax.block_until_ready(
        label_smoothing_cross_entropy(pred3, target3, smoothing=0.1, block_rows=8))
    ref3 = _reference(pred3, target3, smoothing=0.1)
    assert jnp.allclose(loss3, ref3, atol=1e-5, rtol=1e-5), (loss3, ref3)

    print("KERNEL_OK")
</pallas_src>

<mosaic_0001>
module attributes {stable_mosaic.version = 11 : i64} {
  func.func @_ls_ce_kernel(%arg0: i32, %arg1: memref<8x32xf32, #tpu.memory_space<vmem>>, %arg2: memref<8x1xf32, #tpu.memory_space<vmem>>, %arg3: memref<8x128xf32, #tpu.memory_space<vmem>>) attributes {dimension_semantics = [#tpu.dimension_semantics<parallel>], iteration_bounds = array<i64: 1>, scalar_prefetch = 0 : i64, scratch_operands = 0 : i64, tpu.core_type = #tpu.core_type<tc>, window_params = [{transform_indices = @transform_0, window_bounds = array<i64: 8, 32>}, {transform_indices = @transform_1, window_bounds = array<i64: 8, 1>}, {transform_indices = @transform_2, window_bounds = array<i64: 8, 128>}]} {
    %c0 = arith.constant 0 : index
    %c0_0 = arith.constant 0 : index
    %0 = vector.load %arg1[%c0, %c0_0] : memref<8x32xf32, #tpu.memory_space<vmem>>, vector<8x32xf32>
    %cst = arith.constant dense<0xFF800000> : vector<8xf32>
    %1 = vector.multi_reduction <maximumf>, %0, %cst [1] : vector<8x32xf32> to vector<8xf32>
    %2 = vector.shape_cast %1 : vector<8xf32> to vector<8x1xf32>
    %3 = vector.broadcast %2 : vector<8x1xf32> to vector<8x32xf32>
    %4 = arith.subf %0, %3 : vector<8x32xf32>
    %5 = math.exp %4 : vector<8x32xf32>
    %cst_1 = arith.constant dense<0.000000e+00> : vector<8xf32>
    %6 = vector.multi_reduction <add>, %5, %cst_1 [1] : vector<8x32xf32> to vector<8xf32>
    %7 = vector.shape_cast %6 : vector<8xf32> to vector<8x1xf32>
    %8 = math.log %7 : vector<8x1xf32>
    %cst_2 = arith.constant dense<0.000000e+00> : vector<8xf32>
    %9 = vector.multi_reduction <add>, %0, %cst_2 [1] : vector<8x32xf32> to vector<8xf32>
    %10 = vector.shape_cast %9 : vector<8xf32> to vector<8x1xf32>
    %c0_3 = arith.constant 0 : index
    %c0_4 = arith.constant 0 : index
    %11 = vector.load %arg2[%c0_3, %c0_4] : memref<8x1xf32, #tpu.memory_space<vmem>>, vector<8x1xf32>
    %12 = arith.subf %11, %2 : vector<8x1xf32>
    %13 = arith.subf %12, %8 : vector<8x1xf32>
    %14 = arith.addf %2, %8 : vector<8x1xf32>
    %cst_5 = arith.constant 3.200000e+01 : f32
    %15 = vector.broadcast %cst_5 : f32 to vector<8x1xf32>
    %16 = arith.mulf %15, %14 : vector<8x1xf32>
    %17 = arith.subf %10, %16 : vector<8x1xf32>
    %cst_6 = arith.constant 0.0032258064 : f32
    %18 = vector.broadcast %cst_6 : f32 to vector<8x1xf32>
    %19 = arith.mulf %18, %17 : vector<8x1xf32>
    %cst_7 = arith.constant 0.896774172 : f32
    %20 = vector.broadcast %cst_7 : f32 to vector<8x1xf32>
    %21 = arith.mulf %20, %13 : vector<8x1xf32>
    %22 = arith.addf %19, %21 : vector<8x1xf32>
    %cst_8 = arith.constant 0.000000e+00 : f32
    %23 = vector.broadcast %cst_8 : f32 to vector<8x1xf32>
    %24 = arith.subf %23, %22 : vector<8x1xf32>
    %c8_i32 = arith.constant 8 : i32
    %25 = arith.muli %arg0, %c8_i32 : i32
    %26 = tpu.iota {dimensions = array<i32: 0>} : vector<8x1xi32>
    %27 = vector.broadcast %25 : i32 to vector<8x1xi32>
    %28 = arith.addi %27, %26 : vector<8x1xi32>
    %c8_i32_9 = arith.constant 8 : i32
    %29 = vector.broadcast %c8_i32_9 : i32 to vector<8x1xi32>
    %30 = arith.cmpi slt, %28, %29 : vector<8x1xi32>
    %cst_10 = arith.constant 0.000000e+00 : f32
    %31 = vector.broadcast %cst_10 : f32 to vector<8x1xf32>
    %32 = arith.select %30, %24, %31 : vector<8x1xi1>, vector<8x1xf32>
    %cst_11 = arith.constant 0.000000e+00 : f32
    %33 = vector.broadcast %cst_11 : f32 to vector<8x128xf32>
    %34 = vector.shape_cast %32 : vector<8x1xf32> to vector<1x8x1xf32>
    %cst_12 = arith.constant dense<0.000000e+00> : vector<1xf32>
    %35 = vector.multi_reduction <add>, %34, %cst_12 [1, 2] : vector<1x8x1xf32> to vector<1xf32>
    %36 = vector.shape_cast %35 : vector<1xf32> to vector<1x1x1xf32>
    %37 = vector.extract %36[0, 0, 0] : f32 from vector<1x1x1xf32>
    %38 = vector.broadcast %37 : f32 to vector<8x128xf32>
    %39 = arith.addf %33, %38 : vector<8x128xf32>
    %c0_13 = arith.constant 0 : index
    %c0_14 = arith.constant 0 : index
    %40 = vector.load %arg3[%c0_13, %c0_14] : memref<8x128xf32, #tpu.memory_space<vmem>>, vector<8x128xf32>
    tpu.vector_store %arg3[%c0_13, %c0_14], %39 {strides = array<i32>} : memref<8x128xf32, #tpu.memory_space<vmem>>, vector<8x128xf32>,
    return
  }
  func.func @transform_0(%arg0: i32) -> (i32, i32) {
    %c0_i32 = arith.constant 0 : i32
    %c0_i32_0 = arith.constant 0 : i32
    return %arg0, %c0_i32 : i32, i32
  }
  func.func @transform_1(%arg0: i32) -> (i32, i32) {
    %c0_i32 = arith.constant 0 : i32
    %c0_i32_0 = arith.constant 0 : i32
    return %arg0, %c0_i32 : i32, i32
  }
  func.func @transform_2(%arg0: i32) -> (i32, i32) {
    %c0_i32 = arith.constant 0 : i32
    %c0_i32_0 = arith.constant 0 : i32
    return %arg0, %c0_i32 : i32, i32
  }
}

</mosaic_0001>

<llo_original>
// kernel: tpu_custom_call.1
$region0: #{tpu_custom_call.1}
  #allocation0 [shape = 'u32[]', space=smem, size = 0x4, offset = 0x4, fixed_abs, tag = 'smem constant byte address 0x4 - core index']
  #allocation1 [shape = 'u32[144,128]{1,0:T(1,128)}', space=vmem, size = 0x12000, scoped, tag = 'internal scratch']
  %s0 = inlined_call_operand.vmem [shape: f32[8,32], index: 0, kind: input, shape index: {}]
  %s1 = inlined_call_operand.vmem [shape: f32[8,1], index: 1, kind: input, shape index: {}]
  %s2 = inlined_call_operand.hbm [shape: f32[8,128], index: 2, kind: output, shape index: {}]
  %s3 = sld [smem:[#allocation0]]
  $region18: #{tpu_custom_call.1} parent=0
    _
  %s5 = ssub.s32 1, %s3
  %s6 = scalar_select 0, %s5, %s3
  $region1: #{tpu_custom_call.1} parent=0
    #allocation2 [shape = 'u8[4096]{0}', space=vmem, size = 0x1000, scoped, tag = 'output window, operand 0, single buffered']
    #allocation3 [shape = 's32[1]{0}', space=sflag, size = 0x4, scoped, tag = 'scoped memory for tpu_custom_call.1']
    %7 = vsyncpa [#allocation3], 0
    // Predicated region
    $region2: #{tpu_custom_call.1} parent=1 // pred_check
      _
    $region3: #{tpu_custom_call.1} parent=1 // pred_check_branch
      %9 = sbr.rel (0) target = $region5
    $region4: #{tpu_custom_call.1} parent=1 // pred_region
      _
    $region5: #{tpu_custom_call.1} parent=1 // pred_fallthru
      _
    // Predicated region
    $region6: #{tpu_custom_call.1} parent=1 // pred_check
      _
    $region7: #{tpu_custom_call.1} parent=1 // pred_check_branch
      %11 = sbr.rel (0) target = $region9
    $region8: #{tpu_custom_call.1} parent=1 // pred_region
      _
    $region9: #{tpu_custom_call.1} parent=1 // pred_fallthru
      _
    %v12 = vld [vmem:[%s0] sm:$0xff]
    %vm13 = vcmask 261120
    %v14 = vsel %vm13, %v12, -inf
    %15 = vmax.xlane.f32.xlu0 %v14
    %v16 = vpop.xlane.xlu0 %15
    %v17 = vsub.f32 %v12, %v16
    %v18 = vmul.f32 %v17, 1.442695
    %v19 = vpow.pop %v18
    %v20 = vsel %vm13, %v19, 0.0
    %21 = vadd.xlane.f32.xlu0 %v20
    %v22 = vpop.xlane.xlu0 %21
    %v23 = vlog2.pop %v22
    %v24 = vmul.f32 %v23, 0.6931472
    %v25 = vsel %vm13, %v12, 0.0
    %26 = vadd.xlane.f32.xlu0 %v25
    %v27 = vpop.xlane.xlu0 %26
    %v28 = vld [vmem:[%s1] sm:$0xff]
    %v29 = vsub.f32 %v28, %v16
    %v30 = vsub.f32 %v29, %v24
    %v31 = vadd.f32 %v16, %v24
    %v32 = vmul.f32 %v31, 32.0
    %v33 = vsub.f32 %v27, %v32
    %v34 = vmul.f32 %v33, 0.0032258064
    %v35 = vmul.f32 %v30, 0.8967742
    %v36 = vadd.f32 %v34, %v35
    %v37 = vsub.f32 0.0, %v36
    %s38 = smul.u32 0, 8
    %v39 = vlaneseq
    %v40 = vshrl.u32 %v39, 7
    %v41 = vstv %s38
    %v42 = vadd.s32 %v41, %v40
    %vm43 = vcmp.lt.s32.totalorder %v42, 8
    %v44 = vsel %vm43, %v37, 0.0
    %vm45 = vcmask 7168
    %v46 = vsel %vm45, %v44, 0.0
    %47 = vadd.xlane.f32.xlu0 %v46
    %v48 = vpop.xlane.xlu0 %47
    %v49 = vrot.slane %v48, 4
    %v50 = vadd.f32 %v48, %v49
    %v51 = vrot.slane %v50, 2
    %v52 = vadd.f32 %v50, %v51
    %v53 = vrot.slane %v52, 1
    %v54 = vadd.f32 %v52, %v53
    %s55 = vtos %v54
    %v56 = vstv %s55
    %v57 = vadd.f32 %v56, 0.0
    %58 = vst [vmem:[#allocation2] sm:$0xff] %v57
    // Predicated region
    $region10: #{tpu_custom_call.1} parent=1 // pred_check
      _
    $region11: #{tpu_custom_call.1} parent=1 // pred_check_branch
      %60 = sbr.rel (0) target = $region13
    $region12: #{tpu_custom_call.1} parent=1 // pred_region
      %s62 = ssub.s32 128, 128
      %63 = vsyncadd [#allocation3], %s62
      %s65 = sshll.u32 [#allocation2], 4
      %s66 = int_to_ptr.vmem [resolvable:$true] %s65
      %68 = dma.vmem_to_hbm [thread:$0]  %s66, 128, %s2, [#allocation3]
    $region13: #{tpu_custom_call.1} parent=1 // pred_fallthru
      _
    // Predicated region
    $region14: #{tpu_custom_call.1} parent=1 // pred_check
      _
    $region15: #{tpu_custom_call.1} parent=1 // pred_check_branch
      %70 = sbr.rel (0) target = $region17
    $region16: #{tpu_custom_call.1} parent=1 // pred_region
      %71 = dma.done [#allocation3], 128
    $region17: #{tpu_custom_call.1} parent=1 // pred_fallthru
      _
    %72 = vsyncpa [#allocation3], 1

</llo_original>
